<compile_context>
chip_gen: v5e
topology: v5e:2x2
jax: 0.10.0
libtpu: 0.0.40
codegen_flags: <defaults>
</compile_context>

<pallas_src>
import math
from functools import partial

import jax
import jax.numpy as jnp
from jax.experimental import pallas as pl
from jax.experimental.pallas import tpu as pltpu

_S = math.sqrt(2.0 / math.pi)      # sqrt(2/pi)
_SC = _S * 0.044715                # sqrt(2/pi) * 0.044715  (folded at trace time)


def _new_gelu_kernel(x_ref, o_ref, *, compute_dtype):
    x = x_ref[...].astype(compute_dtype)
    # Horner form of sqrt(2/pi) * (x + 0.044715 * x^3)
    inner = x * (_S + _SC * (x * x))
    # 0.5 * x * (1 + tanh(inner)) == x * (0.5 + 0.5 * tanh(inner))
    y = x * (0.5 + 0.5 * jnp.tanh(inner))
    o_ref[...] = y.astype(o_ref.dtype)


def _round_up(n, m):
    return ((n + m - 1) // m) * m


def _chip_kind():
    try:
        return jax.devices()[0].device_kind.lower()
    except Exception:
        return ""


def _pick_lane_width(n, cap=16384):
    """Largest multiple of 128 that divides n (<= cap), or None."""
    if n <= 0 or n % 128 != 0:
        return None
    k = min(n, cap) // 128
    while k >= 1:
        cw = 128 * k
        if n % cw == 0:
            return cw
        k -= 1
    return None


def new_gelu(x, *, target_tile_bytes=None):
    """Tanh-approximation GELU (HF NewGELUActivation), elementwise."""
    if x.size == 0:
        return x

    orig_shape = x.shape
    dtype = x.dtype
    itemsize = jnp.dtype(dtype).itemsize
    N = x.size

    # ---- generation-aware budgets -------------------------------------------
    kind = _chip_kind()
    is_v5e = ("v5e" in kind) or ("v5 lite" in kind) or ("v5lite" in kind)
    is_v6 = "v6" in kind
    is_v7 = "v7" in kind
    if target_tile_bytes is None:
        # v5e/v6e: 128 MiB VMEM -> bigger tiles shave per-step overhead.
        # v7x/unknown: 64 MiB physical / 32 MiB scoped -> stay conservative.
        target_tile_bytes = (8 if (is_v5e or is_v6) else 3) * 1024 * 1024
    vmem_limit = (64 if (is_v5e or is_v6) else 32) * 1024 * 1024

    # ---- compute dtype --------------------------------------------------------
    # bf16/f16 stay native on v6e/v7x (bf16 VPU/EUP); f32 path for f32 inputs
    # and on v5e (no bf16 vector units).
    if jnp.issubdtype(dtype, jnp.floating) and itemsize == 2 and not is_v5e:
        compute_dtype = dtype
    else:
        compute_dtype = jnp.float32

    # ---- choose a lane-dense 2-D layout (elementwise -> reshape is free) -----
    natural_ok = (
        x.ndim >= 2 and x.shape[-1] % 128 == 0 and x.shape[-1] >= 512
    )
    if natural_ok:
        x2 = x.reshape(-1, x.shape[-1])
    else:
        cw = _pick_lane_width(N)
        if cw is not None:
            x2 = x.reshape(N // cw, cw)          # lane-dense, 128-aligned rows
        elif x.ndim >= 2:
            x2 = x.reshape(-1, x.shape[-1])      # fallback: natural 2-D
        elif x.ndim == 1:
            x2 = x.reshape(1, -1)
        else:
            x2 = x.reshape(1, 1)
    R, C = x2.shape

    # Sublane packing: 8 rows/vreg for 32-bit, 16 for 16-bit, 32 for 8-bit.
    row_pack = max(8, 32 // itemsize)
    bytes_per_row = C * itemsize

    # ---- tiling ---------------------------------------------------------------
    if row_pack * bytes_per_row > target_tile_bytes:
        # Very wide C: tile the C axis too so we never blow scoped VMEM.
        block_rows = R if R <= row_pack else row_pack
        cols_fit = (target_tile_bytes // max(1, block_rows * itemsize)) // 128 * 128
        cols_fit = max(128, cols_fit)
        block_cols = C if cols_fit >= C else cols_fit
    else:
        block_cols = C  # lane-dense: full hidden width per tile

        rows_fit = max(1, target_tile_bytes // max(1, bytes_per_row))
        block_rows = max(row_pack, (rows_fit // row_pack) * row_pack)

        # Minimum-steps rule: keep >= 8 grid steps (>= 4 per TC on v7x) when the
        # input is larger than a couple of MiB, but never shrink a tile below
        # ~0.5 MiB (per-step overhead ~0.35 us).
        total_bytes = R * bytes_per_row
        if total_bytes > 2 * 1024 * 1024:
            min_steps = 8
            rows_for_steps = max(row_pack, _round_up(pl.cdiv(R, min_steps), row_pack))
            min_tile_rows = max(
                row_pack,
                ((512 * 1024) // max(1, bytes_per_row)) // row_pack * row_pack,
            )
            block_rows = min(block_rows, max(rows_for_steps, min_tile_rows))

        if block_rows >= R:
            block_rows = R  # full extent (exempt from the 8-divisibility rule)
        elif is_v7:
            # Keep the step count even so the two v7x TensorCores stay balanced.
            steps = pl.cdiv(R, block_rows)
            if steps > 1 and steps % 2 == 1:
                block_rows = max(row_pack, _round_up(pl.cdiv(R, steps + 1), row_pack))
                if block_rows >= R:
                    block_rows = R

    grid = (pl.cdiv(R, block_rows), pl.cdiv(C, block_cols))
    block = (block_rows, block_cols)

    cost = pl.CostEstimate(
        flops=8 * R * C,
        transcendentals=R * C,
        bytes_accessed=2 * R * C * itemsize,
    )

    out = pl.pallas_call(
        partial(_new_gelu_kernel, compute_dtype=compute_dtype),
        out_shape=jax.ShapeDtypeStruct((R, C), dtype),
        grid_spec=pltpu.PrefetchScalarGridSpec(
            num_scalar_prefetch=0,
            grid=grid,
            in_specs=[pl.BlockSpec(block, lambda i, j: (i, j))],
            out_specs=pl.BlockSpec(block, lambda i, j: (i, j)),
        ),
        compiler_params=pltpu.CompilerParams(
            dimension_semantics=("parallel", "parallel"),
            vmem_limit_bytes=vmem_limit,
        ),
        cost_estimate=cost,
    )(x2)

    return out.reshape(orig_shape)


def _new_gelu_ref(x):
    xf = x.astype(jnp.float32)
    y = 0.5 * xf * (1.0 + jnp.tanh(_S * (xf + 0.044715 * xf**3)))
    return y.astype(x.dtype)


if __name__ == "__main__":
    key = jax.random.PRNGKey(0)

    # small shape consistent with the elementwise activation after a GEMM:
    # [batch=8, hidden=256] (relayouted to a single lane-dense row internally)
    x = jax.random.normal(key, (8, 256), dtype=jnp.float32)
    y = jax.block_until_ready(new_gelu(x))
    y_ref = _new_gelu_ref(x)
    assert y.shape == x.shape and y.dtype == x.dtype
    assert jnp.allclose(y, y_ref, atol=1e-5, rtol=1e-5)

    # non-multiple-of-128 hidden dim + 3-D bf16 input (exercises the ragged
    # fallback layout and the native bf16 compute path on v6e/v7x).
    x2 = jax.random.normal(jax.random.PRNGKey(1), (2, 9, 200), dtype=jnp.bfloat16)
    y2 = jax.block_until_ready(new_gelu(x2))
    y2_ref = _new_gelu_ref(x2)
    assert y2.shape == x2.shape and y2.dtype == x2.dtype
    assert jnp.allclose(
        y2.astype(jnp.float32), y2_ref.astype(jnp.float32), atol=2e-2, rtol=2e-2
    )

    # modest lane-dense case (> 2 MiB) to exercise the multi-step pipelined grid.
    x3 = jax.random.normal(jax.random.PRNGKey(2), (1024, 1024), dtype=jnp.float32)
    y3 = jax.block_until_ready(new_gelu(x3))
    assert jnp.allclose(y3, _new_gelu_ref(x3), atol=1e-5, rtol=1e-5)

    print("KERNEL_OK")
</pallas_src>

<mosaic_0001>
module attributes {stable_mosaic.version = 11 : i64} {
  func.func @_new_gelu_kernel(%arg0: i32, %arg1: i32, %arg2: memref<1x2048xf32, #tpu.memory_space<vmem>>, %arg3: memref<1x2048xf32, #tpu.memory_space<vmem>>) attributes {dimension_semantics = [#tpu.dimension_semantics<parallel>, #tpu.dimension_semantics<parallel>], iteration_bounds = array<i64: 1, 1>, scalar_prefetch = 0 : i64, scratch_operands = 0 : i64, tpu.core_type = #tpu.core_type<tc>, window_params = [{transform_indices = @transform_0, window_bounds = array<i64: 1, 2048>}, {transform_indices = @transform_1, window_bounds = array<i64: 1, 2048>}]} {
    %c0 = arith.constant 0 : index
    %c0_0 = arith.constant 0 : index
    %0 = vector.load %arg2[%c0, %c0_0] : memref<1x2048xf32, #tpu.memory_space<vmem>>, vector<1x2048xf32>
    %1 = arith.mulf %0, %0 : vector<1x2048xf32>
    %cst = arith.constant 0.0356774069 : f32
    %2 = vector.broadcast %cst : f32 to vector<1x2048xf32>
    %3 = arith.mulf %2, %1 : vector<1x2048xf32>
    %cst_1 = arith.constant 0.797884583 : f32
    %4 = vector.broadcast %cst_1 : f32 to vector<1x2048xf32>
    %5 = arith.addf %4, %3 : vector<1x2048xf32>
    %6 = arith.mulf %0, %5 : vector<1x2048xf32>
    %7 = math.tanh %6 : vector<1x2048xf32>
    %cst_2 = arith.constant 5.000000e-01 : f32
    %8 = vector.broadcast %cst_2 : f32 to vector<1x2048xf32>
    %9 = arith.mulf %8, %7 : vector<1x2048xf32>
    %cst_3 = arith.constant 5.000000e-01 : f32
    %10 = vector.broadcast %cst_3 : f32 to vector<1x2048xf32>
    %11 = arith.addf %10, %9 : vector<1x2048xf32>
    %12 = arith.mulf %0, %11 : vector<1x2048xf32>
    %c0_4 = arith.constant 0 : index
    %c0_5 = arith.constant 0 : index
    %13 = vector.load %arg3[%c0_4, %c0_5] : memref<1x2048xf32, #tpu.memory_space<vmem>>, vector<1x2048xf32>
    tpu.vector_store %arg3[%c0_4, %c0_5], %12 {strides = array<i32>} : memref<1x2048xf32, #tpu.memory_space<vmem>>, vector<1x2048xf32>,
    return
  }
  func.func @transform_0(%arg0: i32, %arg1: i32) -> (i32, i32) {
    %c0_i32 = arith.constant 0 : i32
    return %arg0, %arg1 : i32, i32
  }
  func.func @transform_1(%arg0: i32, %arg1: i32) -> (i32, i32) {
    %c0_i32 = arith.constant 0 : i32
    return %arg0, %arg1 : i32, i32
  }
}

</mosaic_0001>

<llo_original>
// kernel: tpu_custom_call.1
$region0: #{tpu_custom_call.1}
  #allocation0 [shape = 'u32[]', space=smem, size = 0x4, offset = 0x4, fixed_abs, tag = 'smem constant byte address 0x4 - core index']
  #allocation1 [shape = 'u32[72,128]{1,0:T(1,128)}', space=vmem, size = 0x9000, scoped, tag = 'internal scratch']
  %s0 = inlined_call_operand.hbm [shape: f32[1,2048], index: 0, kind: input, shape index: {}]
  %s1 = inlined_call_operand.hbm [shape: f32[1,2048], index: 1, kind: output, shape index: {}]
  %s2 = sld [smem:[#allocation0]]
  $region18: #{tpu_custom_call.1} parent=0
    _
  %s4 = ssub.s32 1, %s2
  %s5 = scalar_select 0, %s4, %s2
  $region1: #{tpu_custom_call.1} parent=0
    #allocation2 [shape = 'u8[8192]{0}', space=vmem, size = 0x2000, scoped, tag = 'input window, operand 0, single buffered']
    #allocation3 [shape = 's32[1]{0}', space=sflag, size = 0x4, scoped, tag = 'scoped memory for tpu_custom_call.1']
    #allocation4 [shape = 's32[1]{0}', space=sflag, size = 0x4, scoped, tag = 'scoped memory for tpu_custom_call.1']
    #allocation5 [shape = 'u8[8192]{0}', space=vmem, size = 0x2000, scoped, tag = 'output window, operand 0, single buffered']
    %6 = vsyncpa [#allocation3], 0
    %7 = vsyncpa [#allocation4], 0
    // Predicated region
    $region2: #{tpu_custom_call.1} parent=1 // pred_check
      _
    $region3: #{tpu_custom_call.1} parent=1 // pred_check_branch
      %9 = sbr.rel (0) target = $region5
    $region4: #{tpu_custom_call.1} parent=1 // pred_region
      %11 = vsyncadd [#allocation3], 0
      %s13 = sshll.u32 %s0, 4
      %s14 = int_to_ptr.hbm [resolvable:$true] %s13
      %s15 = sshll.u32 [#allocation2], 4
      %s16 = int_to_ptr.vmem [resolvable:$true] %s15
      %18 = dma.hbm_to_vmem [thread:$0]  %s14, 256, %s16, [#allocation3]
    $region5: #{tpu_custom_call.1} parent=1 // pred_fallthru
      _
    // Predicated region
    $region6: #{tpu_custom_call.1} parent=1 // pred_check
      _
    $region7: #{tpu_custom_call.1} parent=1 // pred_check_branch
      %20 = sbr.rel (0) target = $region9
    $region8: #{tpu_custom_call.1} parent=1 // pred_region
      %22 = dma.done [#allocation3], 256
    $region9: #{tpu_custom_call.1} parent=1 // pred_fallthru
      _
    %v23 = vld [vmem:[#allocation2] sm:$0xff]
    %v24 = vld [vmem:[#allocation2 + $0x8] sm:$0xff]
    %v25 = vmul.f32 %v23, %v23
    %v26 = vmul.f32 %v24, %v24
    %v27 = vmul.f32 %v25, 0.035677407
    %v28 = vmul.f32 %v26, 0.035677407
    %v29 = vadd.f32 %v27, 0.7978846
    %v30 = vadd.f32 %v28, 0.7978846
    %v31 = vmul.f32 %v23, %v29
    %v32 = vmul.f32 %v24, %v30
    %v33 = vtanh.pop %v31
    %v34 = vtanh.pop %v32
    %v35 = vmul.f32 %v33, 0.5
    %v36 = vmul.f32 %v34, 0.5
    %v37 = vadd.f32 %v35, 0.5
    %v38 = vadd.f32 %v36, 0.5
    %v39 = vmul.f32 %v23, %v37
    %v40 = vmul.f32 %v24, %v38
    %41 = vst [vmem:[#allocation5] sm:$0xff] %v39
    %42 = vst [vmem:[#allocation5 + $0x8] sm:$0xff] %v40
    // Predicated region
    $region10: #{tpu_custom_call.1} parent=1 // pred_check
      _
    $region11: #{tpu_custom_call.1} parent=1 // pred_check_branch
      %44 = sbr.rel (0) target = $region13
    $region12: #{tpu_custom_call.1} parent=1 // pred_region
      %46 = vsyncadd [#allocation4], 0
      %s48 = sshll.u32 [#allocation5], 4
      %s49 = int_to_ptr.vmem [resolvable:$true] %s48
      %s50 = sshll.u32 %s1, 4
      %s51 = int_to_ptr.hbm [resolvable:$true] %s50
      %53 = dma.vmem_to_hbm [thread:$0]  %s49, 256, %s51, [#allocation4]
    $region13: #{tpu_custom_call.1} parent=1 // pred_fallthru
      _
    // Predicated region
    $region14: #{tpu_custom_call.1} parent=1 // pred_check
      _
    $region15: #{tpu_custom_call.1} parent=1 // pred_check_branch
      %55 = sbr.rel (0) target = $region17
    $region16: #{tpu_custom_call.1} parent=1 // pred_region
      %57 = dma.done [#allocation4], 256
    $region17: #{tpu_custom_call.1} parent=1 // pred_fallthru
      _
    %58 = vsyncpa [#allocation3], 1
    %59 = vsyncpa [#allocation4], 1

</llo_original>
